<compile_context>
chip_gen: v7x
topology: tpu7x:2x2x1
jax: 0.10.0
libtpu: 0.0.40
codegen_flags: <defaults>
</compile_context>

<pallas_src>
import functools
import math

import jax
import jax.numpy as jnp
from jax import lax
from jax.experimental import pallas as pl
from jax.experimental.pallas import tpu as pltpu


def _round_up(x, m):
    return (x + m - 1) // m * m


def _cdiv(a, b):
    return -(-a // b)


def _sine_encoding_kernel(coords_ref, group_ref, freq_ref, shift_ref, out_ref, *, lc):
    # coords_ref: (tm, lc)  folded coordinates (fold rows x n_coords per lane row)
    # group_ref : (1,  w)   int32 constant, group_ref[0, j] = j // (2F)
    # freq_ref  : (1,  w)   f32 constant, frequencies tiled lc times
    # shift_ref : (1,  w)   f32 constant, shifts tiled lc times
    # out_ref   : (tm, w)   lane-dense output block (w % 128 == 0)
    tm = out_ref.shape[0]
    w = out_ref.shape[1]
    coords = coords_ref[...]                                  # (tm, lc) f32
    group = group_ref[...]                                    # (1, w) int32

    # Expand coords across lanes: lane j gets coords[:, j // 2F].
    # lc lane-broadcasts (XLU-side) + (lc - 1) selects (1 VALU op each); no MXU.
    expanded = jnp.broadcast_to(coords[:, 0:1], (tm, w))
    for c in range(1, lc):
        col = jnp.broadcast_to(coords[:, c:c + 1], (tm, w))
        expanded = jnp.where(group == c, col, expanded)

    arg = expanded * freq_ref[...] + shift_ref[...]           # exact f32 on VPU
    out_ref[...] = jnp.sin(arg).astype(out_ref.dtype)


def sine_encoding(coordinates, frequencies, shifts, *, out_dtype=jnp.float32):
    """coordinates: (..., C) float32 -> (..., C * len(frequencies))."""
    coords = jnp.asarray(coordinates, jnp.float32)
    frequencies = jnp.asarray(frequencies, jnp.float32)
    shifts = jnp.asarray(shifts, jnp.float32)

    *lead, n_coords = coords.shape
    n_rows = int(math.prod(lead)) if lead else 1
    two_f = int(frequencies.shape[0])
    width = n_coords * two_f                      # per-row output width C*2F

    # Fold rows into the lane axis so the output block width is a multiple of
    # 128 -> every output store is an unmasked, lane-dense vst.
    fold = 128 // math.gcd(width, 128)
    lc = fold * n_coords                          # folded coords per folded row
    w = lc * two_f                                # folded width, multiple of 128

    out_itemsize = jnp.dtype(out_dtype).itemsize
    row_mult = 8 if out_itemsize >= 4 else (8 * 4) // out_itemsize   # bf16 -> 16

    # Constant per-lane rows (fetched once: constant block index in the grid).
    freq_row = jnp.tile(frequencies, lc).reshape(1, w)
    shift_row = jnp.tile(shifts, lc).reshape(1, w)
    group_row = (jnp.arange(w, dtype=jnp.int32) // two_f).reshape(1, w)

    # Pad rows only to a multiple of `fold` (needed for the lane fold).  The
    # grid handles a ragged last block, so no tile-multiple padding of rows.
    n_rows_pad = _round_up(n_rows, fold)
    coords2d = coords.reshape(n_rows, n_coords)
    if n_rows_pad != n_rows:
        coords2d = jnp.pad(coords2d, ((0, n_rows_pad - n_rows), (0, 0)))
    nf = n_rows_pad // fold
    coords_folded = coords2d.reshape(nf, lc)

    # Generation-aware VMEM budget (128 MiB on v5e/v6e, 64 MiB on v7x).
    phys_vmem = 64 * 1024 * 1024
    try:
        phys_vmem = int(getattr(pltpu.get_tpu_info(), "vmem_capacity_bytes",
                                phys_vmem))
    except Exception:
        pass
    if phys_vmem >= 96 * 1024 * 1024:             # v5e / v6e (128 MiB physical)
        vmem_budget, vmem_limit = 40 * 1024 * 1024, 64 * 1024 * 1024
    else:                                          # v7x (64 MiB physical)
        vmem_budget, vmem_limit = 16 * 1024 * 1024, 32 * 1024 * 1024

    num_cores = 1
    try:
        num_cores = min(2, max(1, int(getattr(jax.devices()[0], "num_cores", 1))))
    except Exception:
        pass

    # Per-folded-row bytes: double-buffered in/out tiles + ~4 f32 intermediates.
    bytes_per_row = 2 * lc * 4 + 2 * w * out_itemsize + 4 * w * 4
    tm_cap = max(row_mult,
                 (vmem_budget // bytes_per_row) // row_mult * row_mult)

    if nf <= row_mult:
        tm, grid_len = nf, 1
    else:
        grid_len = max(1, _cdiv(nf, tm_cap))
        if num_cores > 1 and nf >= num_cores * row_mult:
            grid_len = _round_up(grid_len, num_cores)   # balance the 2 TCs (v7x)
        tm = _round_up(_cdiv(nf, grid_len), row_mult)
        tm = min(tm, (nf // row_mult) * row_mult)        # keep block <= array
        tm = max(tm, row_mult)
        grid_len = _cdiv(nf, tm)

    cost = pl.CostEstimate(
        flops=2 * nf * w,
        transcendentals=nf * w,
        bytes_accessed=int(nf * lc * 4 + nf * w * out_itemsize + 3 * w * 4),
    )

    kernel = functools.partial(_sine_encoding_kernel, lc=lc)
    out_folded = pl.pallas_call(
        kernel,
        out_shape=jax.ShapeDtypeStruct((nf, w), out_dtype),
        grid_spec=pltpu.PrefetchScalarGridSpec(
            num_scalar_prefetch=0,
            grid=(grid_len,),
            in_specs=[
                pl.BlockSpec((tm, lc), lambda i: (i, 0)),
                pl.BlockSpec((1, w), lambda i: (0, 0)),
                pl.BlockSpec((1, w), lambda i: (0, 0)),
                pl.BlockSpec((1, w), lambda i: (0, 0)),
            ],
            out_specs=pl.BlockSpec((tm, w), lambda i: (i, 0)),
        ),
        compiler_params=pltpu.CompilerParams(
            dimension_semantics=("parallel",),
            vmem_limit_bytes=vmem_limit,
        ),
        cost_estimate=cost,
    )(coords_folded, group_row, freq_row, shift_row)

    out2d = out_folded.reshape(n_rows_pad, width)
    if n_rows_pad != n_rows:
        # Only hit when n_rows % fold != 0 (costs one extra output copy).
        out2d = out2d[:n_rows]
    return out2d.reshape(*lead, width)


def make_sine_encoding_params(n_frequencies):
    # frequencies: [f_1, f_1, f_2, f_2, ...] with f_i = 1/1000**(2*i/n_freq)
    base = jnp.array(
        [1.0 / 1000.0 ** (2.0 * i / n_frequencies)
         for i in range(1, n_frequencies + 1)],
        dtype=jnp.float32)
    frequencies = jnp.repeat(base, 2)                       # (2F,)
    shifts = jnp.tile(jnp.array([0.0, math.pi / 2], jnp.float32),
                      n_frequencies)                        # (2F,)
    return frequencies, shifts


def sine_encoding_ref(coords, frequencies, shifts):
    # pure-JAX reference matching the torch forward
    x = coords[..., None] * frequencies + shifts            # (..., C, 2F)
    return jnp.sin(x.reshape(*x.shape[:-2], -1))


if __name__ == "__main__":
    n_frequencies = 8
    n_coordinates = 2
    batch, seq = 2, 8

    frequencies, shifts = make_sine_encoding_params(n_frequencies)

    key = jax.random.PRNGKey(0)
    coordinates = jax.random.uniform(
        key, (batch, seq, n_coordinates), dtype=jnp.float32,
        minval=0.0, maxval=100.0)

    out = jax.block_until_ready(sine_encoding(coordinates, frequencies, shifts))
    ref = sine_encoding_ref(coordinates, frequencies, shifts)
    assert out.shape == (batch, seq, n_frequencies * 2 * n_coordinates)
    # Outputs are in [-1, 1]; 1e-3 absolute tolerance leaves headroom for TPU
    # sin range-reduction differences while still catching layout/index bugs.
    err = float(jnp.max(jnp.abs(out - ref)))
    assert err < 1e-3, f"small case max abs err {err}"

    # Second case exercises a multi-step (possibly multi-core) ragged grid.
    coords_big = jax.random.uniform(
        jax.random.PRNGKey(1), (3, 1000, n_coordinates), dtype=jnp.float32,
        minval=0.0, maxval=100.0)
    out_big = jax.block_until_ready(sine_encoding(coords_big, frequencies, shifts))
    ref_big = sine_encoding_ref(coords_big, frequencies, shifts)
    assert out_big.shape == (3, 1000, n_frequencies * 2 * n_coordinates)
    err_big = float(jnp.max(jnp.abs(out_big - ref_big)))
    assert err_big < 1e-3, f"big case max abs err {err_big}"

    print("KERNEL_OK")
</pallas_src>

<mosaic_0001>
module attributes {stable_mosaic.version = 11 : i64} {
  func.func @_sine_encoding_kernel(%arg0: i32, %arg1: memref<4x8xf32, #tpu.memory_space<vmem>>, %arg2: memref<1x128xi32, #tpu.memory_space<vmem>>, %arg3: memref<1x128xf32, #tpu.memory_space<vmem>>, %arg4: memref<1x128xf32, #tpu.memory_space<vmem>>, %arg5: memref<4x128xf32, #tpu.memory_space<vmem>>) attributes {dimension_semantics = [#tpu.dimension_semantics<parallel>], iteration_bounds = array<i64: 1>, scalar_prefetch = 0 : i64, scratch_operands = 0 : i64, tpu.core_type = #tpu.core_type<tc>, window_params = [{transform_indices = @transform_0, window_bounds = array<i64: 4, 8>}, {pipeline_mode = #tpu.pipeline_mode<synchronous>, transform_indices = @transform_1, window_bounds = array<i64: 1, 128>}, {pipeline_mode = #tpu.pipeline_mode<synchronous>, transform_indices = @transform_2, window_bounds = array<i64: 1, 128>}, {pipeline_mode = #tpu.pipeline_mode<synchronous>, transform_indices = @transform_3, window_bounds = array<i64: 1, 128>}, {transform_indices = @transform_4, window_bounds = array<i64: 4, 128>}]} {
    %c0 = arith.constant 0 : index
    %c0_0 = arith.constant 0 : index
    %0 = vector.load %arg1[%c0, %c0_0] : memref<4x8xf32, #tpu.memory_space<vmem>>, vector<4x8xf32>
    %c0_1 = arith.constant 0 : index
    %c0_2 = arith.constant 0 : index
    %1 = vector.load %arg2[%c0_1, %c0_2] : memref<1x128xi32, #tpu.memory_space<vmem>>, vector<1x128xi32>
    %2 = vector.extract_strided_slice %0 {offsets = [0, 0], sizes = [4, 1], strides = [1, 1]} : vector<4x8xf32> to vector<4x1xf32>
    %3 = vector.shape_cast %2 : vector<4x1xf32> to vector<4x1xf32>
    %4 = vector.broadcast %3 : vector<4x1xf32> to vector<4x128xf32>
    %5 = vector.extract_strided_slice %0 {offsets = [0, 1], sizes = [4, 1], strides = [1, 1]} : vector<4x8xf32> to vector<4x1xf32>
    %6 = vector.shape_cast %5 : vector<4x1xf32> to vector<4x1xf32>
    %7 = vector.broadcast %6 : vector<4x1xf32> to vector<4x128xf32>
    %c1_i32 = arith.constant 1 : i32
    %8 = vector.broadcast %c1_i32 : i32 to vector<1x128xi32>
    %9 = arith.cmpi eq, %1, %8 : vector<1x128xi32>
    %10 = vector.shape_cast %9 : vector<1x128xi1> to vector<1x128xi1>
    %11 = vector.broadcast %10 : vector<1x128xi1> to vector<4x128xi1>
    %12 = arith.select %11, %7, %4 : vector<4x128xi1>, vector<4x128xf32>
    %13 = vector.extract_strided_slice %0 {offsets = [0, 2], sizes = [4, 1], strides = [1, 1]} : vector<4x8xf32> to vector<4x1xf32>
    %14 = vector.shape_cast %13 : vector<4x1xf32> to vector<4x1xf32>
    %15 = vector.broadcast %14 : vector<4x1xf32> to vector<4x128xf32>
    %c2_i32 = arith.constant 2 : i32
    %16 = vector.broadcast %c2_i32 : i32 to vector<1x128xi32>
    %17 = arith.cmpi eq, %1, %16 : vector<1x128xi32>
    %18 = vector.shape_cast %17 : vector<1x128xi1> to vector<1x128xi1>
    %19 = vector.broadcast %18 : vector<1x128xi1> to vector<4x128xi1>
    %20 = arith.select %19, %15, %12 : vector<4x128xi1>, vector<4x128xf32>
    %21 = vector.extract_strided_slice %0 {offsets = [0, 3], sizes = [4, 1], strides = [1, 1]} : vector<4x8xf32> to vector<4x1xf32>
    %22 = vector.shape_cast %21 : vector<4x1xf32> to vector<4x1xf32>
    %23 = vector.broadcast %22 : vector<4x1xf32> to vector<4x128xf32>
    %c3_i32 = arith.constant 3 : i32
    %24 = vector.broadcast %c3_i32 : i32 to vector<1x128xi32>
    %25 = arith.cmpi eq, %1, %24 : vector<1x128xi32>
    %26 = vector.shape_cast %25 : vector<1x128xi1> to vector<1x128xi1>
    %27 = vector.broadcast %26 : vector<1x128xi1> to vector<4x128xi1>
    %28 = arith.select %27, %23, %20 : vector<4x128xi1>, vector<4x128xf32>
    %29 = vector.extract_strided_slice %0 {offsets = [0, 4], sizes = [4, 1], strides = [1, 1]} : vector<4x8xf32> to vector<4x1xf32>
    %30 = vector.shape_cast %29 : vector<4x1xf32> to vector<4x1xf32>
    %31 = vector.broadcast %30 : vector<4x1xf32> to vector<4x128xf32>
    %c4_i32 = arith.constant 4 : i32
    %32 = vector.broadcast %c4_i32 : i32 to vector<1x128xi32>
    %33 = arith.cmpi eq, %1, %32 : vector<1x128xi32>
    %34 = vector.shape_cast %33 : vector<1x128xi1> to vector<1x128xi1>
    %35 = vector.broadcast %34 : vector<1x128xi1> to vector<4x128xi1>
    %36 = arith.select %35, %31, %28 : vector<4x128xi1>, vector<4x128xf32>
    %37 = vector.extract_strided_slice %0 {offsets = [0, 5], sizes = [4, 1], strides = [1, 1]} : vector<4x8xf32> to vector<4x1xf32>
    %38 = vector.shape_cast %37 : vector<4x1xf32> to vector<4x1xf32>
    %39 = vector.broadcast %38 : vector<4x1xf32> to vector<4x128xf32>
    %c5_i32 = arith.constant 5 : i32
    %40 = vector.broadcast %c5_i32 : i32 to vector<1x128xi32>
    %41 = arith.cmpi eq, %1, %40 : vector<1x128xi32>
    %42 = vector.shape_cast %41 : vector<1x128xi1> to vector<1x128xi1>
    %43 = vector.broadcast %42 : vector<1x128xi1> to vector<4x128xi1>
    %44 = arith.select %43, %39, %36 : vector<4x128xi1>, vector<4x128xf32>
    %45 = vector.extract_strided_slice %0 {offsets = [0, 6], sizes = [4, 1], strides = [1, 1]} : vector<4x8xf32> to vector<4x1xf32>
    %46 = vector.shape_cast %45 : vector<4x1xf32> to vector<4x1xf32>
    %47 = vector.broadcast %46 : vector<4x1xf32> to vector<4x128xf32>
    %c6_i32 = arith.constant 6 : i32
    %48 = vector.broadcast %c6_i32 : i32 to vector<1x128xi32>
    %49 = arith.cmpi eq, %1, %48 : vector<1x128xi32>
    %50 = vector.shape_cast %49 : vector<1x128xi1> to vector<1x128xi1>
    %51 = vector.broadcast %50 : vector<1x128xi1> to vector<4x128xi1>
    %52 = arith.select %51, %47, %44 : vector<4x128xi1>, vector<4x128xf32>
    %53 = vector.extract_strided_slice %0 {offsets = [0, 7], sizes = [4, 1], strides = [1, 1]} : vector<4x8xf32> to vector<4x1xf32>
    %54 = vector.shape_cast %53 : vector<4x1xf32> to vector<4x1xf32>
    %55 = vector.broadcast %54 : vector<4x1xf32> to vector<4x128xf32>
    %c7_i32 = arith.constant 7 : i32
    %56 = vector.broadcast %c7_i32 : i32 to vector<1x128xi32>
    %57 = arith.cmpi eq, %1, %56 : vector<1x128xi32>
    %58 = vector.shape_cast %57 : vector<1x128xi1> to vector<1x128xi1>
    %59 = vector.broadcast %58 : vector<1x128xi1> to vector<4x128xi1>
    %60 = arith.select %59, %55, %52 : vector<4x128xi1>, vector<4x128xf32>
    %c0_3 = arith.constant 0 : index
    %c0_4 = arith.constant 0 : index
    %61 = vector.load %arg3[%c0_3, %c0_4] : memref<1x128xf32, #tpu.memory_space<vmem>>, vector<1x128xf32>
    %62 = vector.broadcast %61 : vector<1x128xf32> to vector<4x128xf32>
    %63 = arith.mulf %60, %62 : vector<4x128xf32>
    %c0_5 = arith.constant 0 : index
    %c0_6 = arith.constant 0 : index
    %64 = vector.load %arg4[%c0_5, %c0_6] : memref<1x128xf32, #tpu.memory_space<vmem>>, vector<1x128xf32>
    %65 = vector.broadcast %64 : vector<1x128xf32> to vector<4x128xf32>
    %66 = arith.addf %63, %65 : vector<4x128xf32>
    %67 = math.sin %66 : vector<4x128xf32>
    %c0_7 = arith.constant 0 : index
    %c0_8 = arith.constant 0 : index
    %68 = vector.load %arg5[%c0_7, %c0_8] : memref<4x128xf32, #tpu.memory_space<vmem>>, vector<4x128xf32>
    tpu.vector_store %arg5[%c0_7, %c0_8], %67 {strides = array<i32>} : memref<4x128xf32, #tpu.memory_space<vmem>>, vector<4x128xf32>,
    return
  }
  func.func @transform_0(%arg0: i32) -> (i32, i32) {
    %c0_i32 = arith.constant 0 : i32
    %c0_i32_0 = arith.constant 0 : i32
    return %arg0, %c0_i32 : i32, i32
  }
  func.func @transform_1(%arg0: i32) -> (i32, i32) {
    %c0_i32 = arith.constant 0 : i32
    %c0_i32_0 = arith.constant 0 : i32
    %c0_i32_1 = arith.constant 0 : i32
    return %c0_i32, %c0_i32_0 : i32, i32
  }
  func.func @transform_2(%arg0: i32) -> (i32, i32) {
    %c0_i32 = arith.constant 0 : i32
    %c0_i32_0 = arith.constant 0 : i32
    %c0_i32_1 = arith.constant 0 : i32
    return %c0_i32, %c0_i32_0 : i32, i32
  }
  func.func @transform_3(%arg0: i32) -> (i32, i32) {
    %c0_i32 = arith.constant 0 : i32
    %c0_i32_0 = arith.constant 0 : i32
    %c0_i32_1 = arith.constant 0 : i32
    return %c0_i32, %c0_i32_0 : i32, i32
  }
  func.func @transform_4(%arg0: i32) -> (i32, i32) {
    %c0_i32 = arith.constant 0 : i32
    %c0_i32_0 = arith.constant 0 : i32
    return %arg0, %c0_i32 : i32, i32
  }
}

</mosaic_0001>

<llo_original>
// kernel: tpu_custom_call.1
$region0: #{tpu_custom_call.1}
  #allocation0 [shape = 'u32[]', space=smem, size = 0x4, offset = 0x4, fixed_abs, tag = 'smem constant byte address 0x4 - core index']
  #allocation1 [shape = 'u32[144,128]{1,0:T(1,128)}', space=vmem, size = 0x12000, scoped, tag = 'internal scratch']
  %s0 = inlined_call_operand.hbm [shape: f32[4,8], index: 0, kind: input, shape index: {}]
  %s1 = inlined_call_operand.vmem [shape: s32[1,128], index: 1, kind: input, shape index: {}]
  %s2 = inlined_call_operand.vmem [shape: f32[1,128], index: 2, kind: input, shape index: {}]
  %s3 = inlined_call_operand.vmem [shape: f32[1,128], index: 3, kind: input, shape index: {}]
  %s4 = inlined_call_operand.hbm [shape: f32[4,128], index: 4, kind: output, shape index: {}]
  %s5 = sld [smem:[#allocation0]]
  $region30: #{tpu_custom_call.1} parent=0
    _
  %s7 = ssub.s32 1, %s5
  %s8 = scalar_select 0, %s7, %s5
  $region1: #{tpu_custom_call.1} parent=0
    #allocation2 [shape = 'u8[2048]{0}', space=vmem, size = 0x800, scoped, tag = 'input window, operand 0, single buffered']
    #allocation3 [shape = 's32[1]{0}', space=sflag, size = 0x4, scoped, tag = 'scoped memory for tpu_custom_call.1']
    #allocation4 [shape = 's32[1]{0}', space=sflag, size = 0x4, scoped, tag = 'scoped memory for tpu_custom_call.1']
    #allocation5 [shape = 'u8[2048]{0}', space=vmem, size = 0x800, scoped, tag = 'output window, operand 0, single buffered']
    %9 = vsyncpa [#allocation3], 0
    %10 = vsyncpa [#allocation4], 0
    // Predicated region
    $region2: #{tpu_custom_call.1} parent=1 // pred_check
      _
    $region3: #{tpu_custom_call.1} parent=1 // pred_check_branch
      %12 = sbr.rel (0) target = $region5
    $region4: #{tpu_custom_call.1} parent=1 // pred_region
      %s14 = ssub.s32 64, 64
      %15 = vsyncadd [#allocation3], %s14
      %s17 = sshll.u32 [#allocation2], 4
      %s18 = int_to_ptr.vmem [resolvable:$true] %s17
      %20 = dma.hbm_to_vmem [thread:$0]  %s0, 64, %s18, [#allocation3]
    $region5: #{tpu_custom_call.1} parent=1 // pred_fallthru
      _
    // Predicated region
    $region6: #{tpu_custom_call.1} parent=1 // pred_check
      _
    $region7: #{tpu_custom_call.1} parent=1 // pred_check_branch
      %22 = sbr.rel (0) target = $region9
    $region8: #{tpu_custom_call.1} parent=1 // pred_region
      _
    $region9: #{tpu_custom_call.1} parent=1 // pred_fallthru
      _
    // Predicated region
    $region10: #{tpu_custom_call.1} parent=1 // pred_check
      _
    $region11: #{tpu_custom_call.1} parent=1 // pred_check_branch
      %24 = sbr.rel (0) target = $region13
    $region12: #{tpu_custom_call.1} parent=1 // pred_region
      _
    $region13: #{tpu_custom_call.1} parent=1 // pred_fallthru
      _
    // Predicated region
    $region14: #{tpu_custom_call.1} parent=1 // pred_check
      _
    $region15: #{tpu_custom_call.1} parent=1 // pred_check_branch
      %26 = sbr.rel (0) target = $region17
    $region16: #{tpu_custom_call.1} parent=1 // pred_region
      _
    $region17: #{tpu_custom_call.1} parent=1 // pred_fallthru
      _
    // Predicated region
    $region18: #{tpu_custom_call.1} parent=1 // pred_check
      _
    $region19: #{tpu_custom_call.1} parent=1 // pred_check_branch
      %28 = sbr.rel (0) target = $region21
    $region20: #{tpu_custom_call.1} parent=1 // pred_region
      %29 = dma.done [#allocation3], 64
    $region21: #{tpu_custom_call.1} parent=1 // pred_fallthru
      _
    %v30 = vld [vmem:[#allocation2] sm:$0xf]
    %v31 = vld [vmem:[%s1] sm:$0x1]
    %33 = vset.pattern.permute.xlu0 0
    %34 = vperm.xlu0 %33, %v30
    %v35 = vpop.permute.xlu0 %34
    %37 = vset.pattern.permute.xlu0 1
    %38 = vperm.xlu0 %37, %v30
    %v39 = vpop.permute.xlu0 %38
    %vm41 = vcmp.eq.s32.totalorder %v31, 1
    %v42 = vsel %vm41, 1, 0
    %v43 = vlaneseq
    %v44 = vshrl.u32 %v43, 7
    %v45 = vsub.s32 0, %v44
    %v46 = vrot.slane %v42, %v45
    %vm47 = vcmp.eq.s32.totalorder %v46, 1
    %v48 = vsel %vm47, %v39, %v35
    %49 = vset.pattern.permute.xlu0 2
    %50 = vperm.xlu0 %49, %v30
    %v51 = vpop.permute.xlu0 %50
    %vm53 = vcmp.eq.s32.totalorder %v31, 2
    %v54 = vsel %vm53, 1, 0
    %v55 = vlaneseq
    %v56 = vshrl.u32 %v55, 7
    %v57 = vsub.s32 0, %v56
    %v58 = vrot.slane %v54, %v57
    %vm59 = vcmp.eq.s32.totalorder %v58, 1
    %v60 = vsel %vm59, %v51, %v48
    %61 = vset.pattern.permute.xlu0 3
    %62 = vperm.xlu0 %61, %v30
    %v63 = vpop.permute.xlu0 %62
    %vm65 = vcmp.eq.s32.totalorder %v31, 3
    %v66 = vsel %vm65, 1, 0
    %v67 = vlaneseq
    %v68 = vshrl.u32 %v67, 7
    %v69 = vsub.s32 0, %v68
    %v70 = vrot.slane %v66, %v69
    %vm71 = vcmp.eq.s32.totalorder %v70, 1
    %v72 = vsel %vm71, %v63, %v60
    %73 = vset.pattern.permute.xlu0 4
    %74 = vperm.xlu0 %73, %v30
    %v75 = vpop.permute.xlu0 %74
    %vm77 = vcmp.eq.s32.totalorder %v31, 4
    %v78 = vsel %vm77, 1, 0
    %v79 = vlaneseq
    %v80 = vshrl.u32 %v79, 7
    %v81 = vsub.s32 0, %v80
    %v82 = vrot.slane %v78, %v81
    %vm83 = vcmp.eq.s32.totalorder %v82, 1
    %v84 = vsel %vm83, %v75, %v72
    %85 = vset.pattern.permute.xlu0 5
    %86 = vperm.xlu0 %85, %v30
    %v87 = vpop.permute.xlu0 %86
    %vm89 = vcmp.eq.s32.totalorder %v31, 5
    %v90 = vsel %vm89, 1, 0
    %v91 = vlaneseq
    %v92 = vshrl.u32 %v91, 7
    %v93 = vsub.s32 0, %v92
    %v94 = vrot.slane %v90, %v93
    %vm95 = vcmp.eq.s32.totalorder %v94, 1
    %v96 = vsel %vm95, %v87, %v84
    %97 = vset.pattern.permute.xlu0 6
    %98 = vperm.xlu0 %97, %v30
    %v99 = vpop.permute.xlu0 %98
    %vm101 = vcmp.eq.s32.totalorder %v31, 6
    %v102 = vsel %vm101, 1, 0
    %v103 = vlaneseq
    %v104 = vshrl.u32 %v103, 7
    %v105 = vsub.s32 0, %v104
    %v106 = vrot.slane %v102, %v105
    %vm107 = vcmp.eq.s32.totalorder %v106, 1
    %v108 = vsel %vm107, %v99, %v96
    %109 = vset.pattern.permute.xlu0 7
    %110 = vperm.xlu0 %109, %v30
    %v111 = vpop.permute.xlu0 %110
    %vm113 = vcmp.eq.s32.totalorder %v31, 7
    %v114 = vsel %vm113, 1, 0
    %v115 = vlaneseq
    %v116 = vshrl.u32 %v115, 7
    %v117 = vsub.s32 0, %v116
    %v118 = vrot.slane %v114, %v117
    %vm119 = vcmp.eq.s32.totalorder %v118, 1
    %v120 = vsel %vm119, %v111, %v108
    %v121 = vld [vmem:[%s2] sm:$0x1]
    %v123 = vlaneseq
    %v124 = vshrl.u32 %v123, 7
    %v125 = vsub.s32 0, %v124
    %v126 = vrot.slane %v121, %v125
    %v128 = vmul.f32 %v120, %v126
    %v129 = vld [vmem:[%s3] sm:$0x1]
    %v131 = vlaneseq
    %v132 = vshrl.u32 %v131, 7
    %v133 = vsub.s32 0, %v132
    %v134 = vrot.slane %v129, %v133
    %v136 = vadd.f32 %v128, %v134
    %v137 = vand.u32 2147483647, %v136
    %vm138 = vcmp.le.f32.partialorder %v137, 0.7853982
    %vm139 = vcmp.lt.s32.totalorder %v136, 0
    %v140 = vand.u32 %v136, 2139095040
    %v141 = vshrl.u32 %v140, 23
    %v142 = vsub.s32 %v141, 127
    %v143 = vand.u32 2147483647, %v136
    %v144 = vand.u32 %v143, 8388607
    %v145 = vor.u32 %v144, 8388608
    %v146 = vsub.s32 0, %v145
    %v147 = vadd.s32 %v142, 1
    %vm148 = vcmp.gt.s32.totalorder %v147, 0
    %v149 = vsel %vm148, %v147, 0
    %v150 = vshrl.u32 %v149, 5
    %v151 = vand.u32 %v149, 31
    %v152 = vsub.s32 32, %v151
    %v153 = vshrl.u32 683565275, %v152
    %v154 = vshll.u32 683565275, %v151
    %v155 = vshrl.u32 2475754826, %v152
    %v156 = vor.u32 %v154, %v155
    %v157 = vshll.u32 2475754826, %v151
    %v158 = vshrl.u32 2131351028, %v152
    %v159 = vor.u32 %v157, %v158
    %v160 = vshll.u32 2131351028, %v151
    %v161 = vshrl.u32 2102212464, %v152
    %v162 = vor.u32 %v160, %v161
    %v163 = vshll.u32 2102212464, %v151
    %v164 = vshrl.u32 920167782, %v152
    %v165 = vor.u32 %v163, %v164
    %v166 = vshll.u32 920167782, %v151
    %v167 = vshrl.u32 1326507024, %v152
    %v168 = vor.u32 %v166, %v167
    %vm169 = vcmp.lt.s32.totalorder %v150, 1
    %vm170 = vcmp.lt.s32.totalorder %v150, 2
    %vm171 = vcmp.lt.s32.totalorder %v150, 3
    %vm172 = vcmp.lt.s32.totalorder %v150, 4
    %v173 = vsel %vm169, %v153, %v156
    %v174 = vsel %vm172, %v162, 2102212464
    %v175 = vsel %vm171, %v159, %v174
    %v176 = vsel %vm170, %v173, %v175
    %v177 = vsel %vm169, %v156, %v159
    %v178 = vsel %vm172, %v165, 920167782
    %v179 = vsel %vm171, %v162, %v178
    %v180 = vsel %vm170, %v177, %v179
    %v181 = vsel %vm169, %v159, %v162
    %v182 = vsel %vm172, %v168, 1326507024
    %v183 = vsel %vm171, %v165, %v182
    %v184 = vsel %vm170, %v181, %v183
    %v185 = vshll.u32 %v145, 8
    %v186 = vmul.u32.u64.compose %v185, %v184
    %v187 = vextract.low.u32 %v186
    %v188 = vextract.high.u32 %v186
    %v189 = vmul.u32.u64.compose %v185, %v180
    %v190 = vextract.low.u32 %v189
    %v191 = vextract.high.u32 %v189
    %v192 = vmul.u32 %v185, %v176
    %v193 = vadd.s32 %v188, %v190
    %vm194 = vc.u32 %v188, %v190
    %v195 = vadd.s32 %v191, 1
    %v196 = vsel %vm194, %v195, %v191
    %v197 = vadd.s32 %v192, %v196
    %v198 = vadd.s32 %v197, 536870912
    %v199 = vshrl.u32 %v198, 30
    %v200 = vshll.u32 %v199, 30
    %v201 = vsub.s32 %v197, %v200
    %vm202 = vcmp.lt.s32.totalorder %v201, 0
    %v203 = vsub.s32 0, %v201
    %v204 = vsel %vm202, %v203, %v201
    %v205 = vclz %v204
    %v206 = vsub.s32 %v205, 2
    %vm207 = vcmp.gt.s32.totalorder 0, %v206
    %v208 = vsel %vm207, 0, %v206
    %v209 = vsub.s32 32, %v208
    %v210 = vshll.u32 %v201, %v208
    %v211 = vshrl.u32 %v193, %v209
    %v212 = vor.u32 %v210, %v211
    %v213 = vsub.s32 4294967266, %v208
    %v214 = vadd.s32 %v213, 127
    %v215 = vshll.u32 %v214, 23
    %v216 = vor.u32 4788187, %v215
    %v217 = vand.u32 2147483647, %v216
    %v219 = vcvt.s32.f32 %v212
    %v220 = vmul.f32 %v219, %v217
    %v221 = vxor.u32 %v220, 2147483648
    %v222 = vsel %vm139, %v221, %v220
    %v223 = vsub.s32 4, %v199
    %v224 = vsel %vm139, %v223, %v199
    %v225 = vsel %vm138, %v136, %v222
    %v226 = vsel %vm138, 0, %v224
    %v227 = vcosq.f32.pop %v225
    %v228 = vsinq.f32.pop %v225
    %vm229 = vweird.f32 %v136
    %v230 = vadd.s32 %v226, 3
    %v231 = vand.u32 %v230, 3
    %vm232 = vcmp.lt.s32.totalorder %v231, 2
    %vm233 = vcmp.eq.s32.totalorder %v231, 0
    %v234 = vxor.u32 %v228, 2147483648
    %v235 = vsel %vm233, %v227, %v234
    %vm236 = vcmp.eq.s32.totalorder %v231, 2
    %v237 = vxor.u32 %v227, 2147483648
    %v238 = vsel %vm236, %v237, %v228
    %v239 = vsel %vm232, %v235, %v238
    %v240 = vsel %vm229, nan, %v239
    %241 = vst [vmem:[#allocation5] sm:$0xf] %v240
    // Predicated region
    $region22: #{tpu_custom_call.1} parent=1 // pred_check
      _
    $region23: #{tpu_custom_call.1} parent=1 // pred_check_branch
      %243 = sbr.rel (0) target = $region25
    $region24: #{tpu_custom_call.1} parent=1 // pred_region
      %s245 = ssub.s32 64, 64
      %246 = vsyncadd [#allocation4], %s245
      %s248 = sshll.u32 [#allocation5], 4
      %s249 = int_to_ptr.vmem [resolvable:$true] %s248
      %251 = dma.vmem_to_hbm [thread:$0]  %s249, 64, %s4, [#allocation4]
    $region25: #{tpu_custom_call.1} parent=1 // pred_fallthru
      _
    // Predicated region
    $region26: #{tpu_custom_call.1} parent=1 // pred_check
      _
    $region27: #{tpu_custom_call.1} parent=1 // pred_check_branch
      %253 = sbr.rel (0) target = $region29
    $region28: #{tpu_custom_call.1} parent=1 // pred_region
      %254 = dma.done [#allocation4], 64
    $region29: #{tpu_custom_call.1} parent=1 // pred_fallthru
      _
    %255 = vsyncpa [#allocation3], 1
    %256 = vsyncpa [#allocation4], 1

</llo_original>
